<compile_context>
chip_gen: v6e
topology: v6e:2x2x1
jax: 0.10.0
libtpu: 0.0.40
codegen_flags: <defaults>
</compile_context>

<pallas_src>
import numpy as np
import jax
import jax.numpy as jnp
from jax.experimental import pallas as pl
from jax.experimental.pallas import tpu as pltpu

EPS = 1e-5


# --------------------------------------------------------------------------- #
# kernel: fused transposed conv (one MXU matmul per tile) + per-tile BN stats
# --------------------------------------------------------------------------- #
def _deconv_fused_kernel(x_ref, w4_ref, out_ref, psum_ref, pssq_ref):
    """One (batch, H-tile) grid step.

    x_ref   : (1, TH*W, 4*Cin)   bf16  [x00|x01|x10|x11] per input pixel
    w4_ref  : (4*Cin, 4*Cout)    bf16  zero-blocked taps, cols = [p00|p01|p10|p11]
    out_ref : (1, TH*W, 4*Cout)  bf16  matmul-native, lane-dense layout
    psum_ref/pssq_ref : (1, 1, 1, 4*Cout) f32  per-(n, h-tile) BN partials
    """
    x4 = x_ref[0]                                              # (TH*W, 4*Cin)

    # single fused MXU matmul: all 9 taps / 4 sub-pixel phases, f32 accumulate
    r = jnp.dot(x4, w4_ref[...], preferred_element_type=jnp.float32)

    # BatchNorm partial statistics from the f32 accumulator (before bf16 cast)
    psum_ref[0, 0] = jnp.sum(r, axis=0, keepdims=True)
    pssq_ref[0, 0] = jnp.sum(r * r, axis=0, keepdims=True)

    # store in the matmul's native layout -> unmasked full-width store
    out_ref[0] = r.astype(out_ref.dtype)


# --------------------------------------------------------------------------- #
# tile-size helper
# --------------------------------------------------------------------------- #
def _pick_th(h, w, row_bytes, target_bytes=4 << 20):
    """Largest TH dividing h with (TH*w) sublane-aligned under the byte budget."""
    cap = int(max(1, min(h, target_bytes // max(int(row_bytes), 1))))
    if cap >= h:
        return h
    for th in range(cap, 0, -1):
        if h % th == 0 and (th * w) % 8 == 0:
            return th
    return h  # fallback: one tile per batch element (always layout-legal)


# --------------------------------------------------------------------------- #
# public wrapper (NCHW in / NCHW out, like the PyTorch module)
# --------------------------------------------------------------------------- #
def deconv_bn_relu(x_nchw, w, b, gamma, beta):
    """x_nchw: (N, Cin, H, W);  w: (Cin, Cout, 3, 3) (PyTorch ConvTranspose2d)."""
    N, Cin, H, W = x_nchw.shape
    Cout = w.shape[1]
    Ho, Wo = 2 * H, 2 * W
    C4 = 4 * Cout
    # ConvTranspose2d bias is exactly cancelled by training-mode BatchNorm
    # (per-channel constant shift) -> it has no effect on this forward pass.
    del b

    # ---- XLA glue on the small input: NCHW->NHWC, zero pad, 4 shifted taps --
    x_nhwc = jnp.transpose(x_nchw, (0, 2, 3, 1)).astype(jnp.float32)
    xp = jnp.pad(x_nhwc, ((0, 0), (0, 1), (0, 1), (0, 0)))
    x4 = jnp.concatenate(
        [xp[:, :H, :W], xp[:, :H, 1:],       # x[i, j]    x[i, j+1]
         xp[:, 1:, :W], xp[:, 1:, 1:]],      # x[i+1, j]  x[i+1, j+1]
        axis=-1)
    x4 = x4.astype(jnp.bfloat16).reshape(N, H * W, 4 * Cin)

    # ---- combined (4*Cin, 4*Cout) tap matrix: one matmul = all taps/phases --
    # y[2i,  2j  ] = x00@W[1,1]
    # y[2i,  2j+1] = x00@W[1,2] + x01@W[1,0]
    # y[2i+1,2j  ] = x00@W[2,1] + x10@W[0,1]
    # y[2i+1,2j+1] = x00@W[2,2] + x01@W[2,0] + x10@W[0,2] + x11@W[0,0]
    wt = jnp.transpose(w, (2, 3, 0, 1)).astype(jnp.float32)    # (3,3,Cin,Cout)
    z = jnp.zeros((Cin, Cout), jnp.float32)
    #                 p00        p01        p10        p11
    w4 = jnp.block([
        [wt[1, 1], wt[1, 2], wt[2, 1], wt[2, 2]],   # x[i,   j  ]
        [z,        wt[1, 0], z,        wt[2, 0]],   # x[i,   j+1]
        [z,        z,        wt[0, 1], wt[0, 2]],   # x[i+1, j  ]
        [z,        z,        z,        wt[0, 0]],   # x[i+1, j+1]
    ]).astype(jnp.bfloat16)                          # (4*Cin, 4*Cout)

    # ---- tiling --------------------------------------------------------------
    row_bytes = W * 4 * Cin * 2 + W * C4 * 2         # bf16 in-row + bf16 out-row
    TH = _pick_th(H, W, row_bytes)                   # ~4 MiB tiles, sublane-aligned
    nHT = H // TH

    conv_out, psum, pssq = pl.pallas_call(
        _deconv_fused_kernel,
        out_shape=(
            jax.ShapeDtypeStruct((N, H * W, C4), jnp.bfloat16),
            jax.ShapeDtypeStruct((N, nHT, 1, C4), jnp.float32),
            jax.ShapeDtypeStruct((N, nHT, 1, C4), jnp.float32),
        ),
        grid_spec=pltpu.PrefetchScalarGridSpec(
            num_scalar_prefetch=0,
            grid=(N, nHT),
            in_specs=[
                pl.BlockSpec((1, TH * W, 4 * Cin), lambda n, h: (n, h, 0)),
                pl.BlockSpec((4 * Cin, C4), lambda n, h: (0, 0)),
            ],
            out_specs=[
                pl.BlockSpec((1, TH * W, C4), lambda n, h: (n, h, 0)),
                pl.BlockSpec((1, 1, 1, C4), lambda n, h: (n, h, 0, 0)),
                pl.BlockSpec((1, 1, 1, C4), lambda n, h: (n, h, 0, 0)),
            ],
        ),
        compiler_params=pltpu.CompilerParams(
            dimension_semantics=("parallel", "parallel"),
            vmem_limit_bytes=64 * 1024 * 1024,
        ),
        cost_estimate=pl.CostEstimate(
            flops=2 * N * H * W * (4 * Cin) * C4,
            transcendentals=0,
            bytes_accessed=(N * H * W * 4 * Cin * 2       # X4 read (bf16)
                            + 4 * Cin * C4 * 2            # W4
                            + N * H * W * C4 * 2          # conv_out write (bf16)
                            + 2 * N * nHT * C4 * 4),      # BN partials
        ),
    )(x4, w4)

    # ---- fold training-mode BatchNorm from the per-tile partial sums --------
    count = N * Ho * Wo
    mean = jnp.sum(psum.reshape(-1, Cout), axis=0) / count
    msq = jnp.sum(pssq.reshape(-1, Cout), axis=0) / count
    var = jnp.maximum(msq - mean * mean, 0.0)
    scale = gamma.astype(jnp.float32) * jax.lax.rsqrt(var + EPS)
    shift = beta.astype(jnp.float32) - mean * scale
    # TODO(synk): running_mean/running_var buffer updates (training-mode side
    # effect of nn.BatchNorm2d) are not modeled here.

    # ---- BN scale/shift + ReLU + sub-pixel interleave + NCHW transpose ------
    # All fused by XLA into a single pass over conv_out (read bf16, write f32).
    y = conv_out.reshape(N, H, W, 2, 2, Cout).astype(jnp.float32)
    y = jnp.maximum(y * scale + shift, 0.0)
    out = jnp.transpose(y, (0, 5, 1, 3, 2, 4))       # (N, Cout, H, 2, W, 2)
    return out.reshape(N, Cout, Ho, Wo)


# ---------------------------- numpy reference --------------------------------
def _numpy_ref(x, w, b, gamma, beta):
    """Direct (scatter) ConvTranspose2d + training-mode BN + ReLU, float64."""
    N, Cin, H, W = x.shape
    Cout = w.shape[1]
    Ho, Wo = 2 * H, 2 * W
    y = np.zeros((N, Cout, Ho, Wo), np.float64)
    for kh in range(3):
        for kw in range(3):
            contrib = np.einsum('nchw,cd->ndhw', x, w[:, :, kh, kw])
            for ih in range(H):
                oh = ih * 2 - 1 + kh
                if not (0 <= oh < Ho):
                    continue
                for iw in range(W):
                    ow = iw * 2 - 1 + kw
                    if not (0 <= ow < Wo):
                        continue
                    y[:, :, oh, ow] += contrib[:, :, ih, iw]
    y += b[None, :, None, None]
    mean = y.mean(axis=(0, 2, 3))
    var = y.var(axis=(0, 2, 3))  # biased, as used by torch BN in training
    yn = (y - mean[None, :, None, None]) / np.sqrt(var[None, :, None, None] + EPS)
    yn = yn * gamma[None, :, None, None] + beta[None, :, None, None]
    return np.maximum(yn, 0.0)


if __name__ == "__main__":
    N, n_in, n_out, H, W = 2, 4, 32, 16, 16

    key = jax.random.PRNGKey(0)
    kx, kw, kb, kg, kbe = jax.random.split(key, 5)
    x = jax.random.normal(kx, (N, n_in, H, W), jnp.float32)
    w = jax.random.normal(kw, (n_in, n_out, 3, 3), jnp.float32) * 0.2
    b = jax.random.normal(kb, (n_out,), jnp.float32) * 0.1
    gamma = 1.0 + 0.1 * jax.random.normal(kg, (n_out,), jnp.float32)
    beta = 0.1 * jax.random.normal(kbe, (n_out,), jnp.float32)

    fn = jax.jit(deconv_bn_relu)
    out = jax.block_until_ready(fn(x, w, b, gamma, beta))
    assert out.shape == (N, n_out, 2 * H, 2 * W)

    ref = _numpy_ref(np.asarray(x, np.float64), np.asarray(w, np.float64),
                     np.asarray(b, np.float64), np.asarray(gamma, np.float64),
                     np.asarray(beta, np.float64))
    # bf16 MXU inputs + bf16 stored intermediate (f32 accumulation / f32 stats)
    np.testing.assert_allclose(np.asarray(out), ref, rtol=5e-2, atol=5e-2)

    print("KERNEL_OK")
</pallas_src>

<mosaic_0001>
module attributes {stable_mosaic.version = 11 : i64} {
  func.func @_deconv_fused_kernel(%arg0: i32, %arg1: i32, %arg2: memref<1x256x16xbf16, #tpu.memory_space<vmem>>, %arg3: memref<16x128xbf16, #tpu.memory_space<vmem>>, %arg4: memref<1x256x128xbf16, #tpu.memory_space<vmem>>, %arg5: memref<1x1x1x128xf32, #tpu.memory_space<vmem>>, %arg6: memref<1x1x1x128xf32, #tpu.memory_space<vmem>>) attributes {dimension_semantics = [#tpu.dimension_semantics<parallel>, #tpu.dimension_semantics<parallel>], iteration_bounds = array<i64: 2, 1>, scalar_prefetch = 0 : i64, scratch_operands = 0 : i64, tpu.core_type = #tpu.core_type<tc>, window_params = [{transform_indices = @transform_0, window_bounds = array<i64: 1, 256, 16>}, {pipeline_mode = #tpu.pipeline_mode<synchronous>, transform_indices = @transform_1, window_bounds = array<i64: 16, 128>}, {transform_indices = @transform_2, window_bounds = array<i64: 1, 256, 128>}, {transform_indices = @transform_3, window_bounds = array<i64: 1, 1, 1, 128>}, {transform_indices = @transform_4, window_bounds = array<i64: 1, 1, 1, 128>}]} {
    %c0 = arith.constant 0 : index
    %c0_0 = arith.constant 0 : index
    %c0_1 = arith.constant 0 : index
    %0 = vector.load %arg2[%c0, %c0_0, %c0_1] : memref<1x256x16xbf16, #tpu.memory_space<vmem>>, vector<1x256x16xbf16>
    %1 = vector.shape_cast %0 : vector<1x256x16xbf16> to vector<256x16xbf16>
    %c0_2 = arith.constant 0 : index
    %c0_3 = arith.constant 0 : index
    %2 = vector.load %arg3[%c0_2, %c0_3] : memref<16x128xbf16, #tpu.memory_space<vmem>>, vector<16x128xbf16>
    %cst = arith.constant dense<0.000000e+00> : vector<256x128xf32>
    %3 = tpu.matmul %1, %2, %cst {dimension_numbers = #tpu.dot_dimension_numbers<[1], [0], [0], [1], [0, 0, 1, 1], [], []>} : vector<256x16xbf16>, vector<16x128xbf16>, vector<256x128xf32> -> vector<256x128xf32>
    %cst_4 = arith.constant dense<0.000000e+00> : vector<128xf32>
    %4 = vector.multi_reduction <add>, %3, %cst_4 [0] : vector<256x128xf32> to vector<128xf32>
    %5 = vector.shape_cast %4 : vector<128xf32> to vector<1x128xf32>
    %c0_5 = arith.constant 0 : index
    %c0_6 = arith.constant 0 : index
    %c0_7 = arith.constant 0 : index
    %c0_8 = arith.constant 0 : index
    %6 = vector.load %arg5[%c0_5, %c0_6, %c0_7, %c0_8] : memref<1x1x1x128xf32, #tpu.memory_space<vmem>>, vector<1x1x1x128xf32>
    %7 = vector.shape_cast %6 : vector<1x1x1x128xf32> to vector<1x128xf32>
    %8 = vector.shape_cast %5 : vector<1x128xf32> to vector<1x1x1x128xf32>
    tpu.vector_store %arg5[%c0_5, %c0_6, %c0_7, %c0_8], %8 {strides = array<i32>} : memref<1x1x1x128xf32, #tpu.memory_space<vmem>>, vector<1x1x1x128xf32>,
    %9 = arith.mulf %3, %3 : vector<256x128xf32>
    %cst_9 = arith.constant dense<0.000000e+00> : vector<128xf32>
    %10 = vector.multi_reduction <add>, %9, %cst_9 [0] : vector<256x128xf32> to vector<128xf32>
    %11 = vector.shape_cast %10 : vector<128xf32> to vector<1x128xf32>
    %c0_10 = arith.constant 0 : index
    %c0_11 = arith.constant 0 : index
    %c0_12 = arith.constant 0 : index
    %c0_13 = arith.constant 0 : index
    %12 = vector.load %arg6[%c0_10, %c0_11, %c0_12, %c0_13] : memref<1x1x1x128xf32, #tpu.memory_space<vmem>>, vector<1x1x1x128xf32>
    %13 = vector.shape_cast %12 : vector<1x1x1x128xf32> to vector<1x128xf32>
    %14 = vector.shape_cast %11 : vector<1x128xf32> to vector<1x1x1x128xf32>
    tpu.vector_store %arg6[%c0_10, %c0_11, %c0_12, %c0_13], %14 {strides = array<i32>} : memref<1x1x1x128xf32, #tpu.memory_space<vmem>>, vector<1x1x1x128xf32>,
    %15 = arith.truncf %3 : vector<256x128xf32> to vector<256x128xbf16>
    %c0_14 = arith.constant 0 : index
    %c0_15 = arith.constant 0 : index
    %c0_16 = arith.constant 0 : index
    %16 = vector.load %arg4[%c0_14, %c0_15, %c0_16] : memref<1x256x128xbf16, #tpu.memory_space<vmem>>, vector<1x256x128xbf16>
    %17 = vector.shape_cast %16 : vector<1x256x128xbf16> to vector<256x128xbf16>
    %18 = vector.shape_cast %15 : vector<256x128xbf16> to vector<1x256x128xbf16>
    tpu.vector_store %arg4[%c0_14, %c0_15, %c0_16], %18 {strides = array<i32>} : memref<1x256x128xbf16, #tpu.memory_space<vmem>>, vector<1x256x128xbf16>,
    return
  }
  func.func @transform_0(%arg0: i32, %arg1: i32) -> (i32, i32, i32) {
    %c0_i32 = arith.constant 0 : i32
    %c0_i32_0 = arith.constant 0 : i32
    return %arg0, %arg1, %c0_i32 : i32, i32, i32
  }
  func.func @transform_1(%arg0: i32, %arg1: i32) -> (i32, i32) {
    %c0_i32 = arith.constant 0 : i32
    %c0_i32_0 = arith.constant 0 : i32
    %c0_i32_1 = arith.constant 0 : i32
    return %c0_i32, %c0_i32_0 : i32, i32
  }
  func.func @transform_2(%arg0: i32, %arg1: i32) -> (i32, i32, i32) {
    %c0_i32 = arith.constant 0 : i32
    %c0_i32_0 = arith.constant 0 : i32
    return %arg0, %arg1, %c0_i32 : i32, i32, i32
  }
  func.func @transform_3(%arg0: i32, %arg1: i32) -> (i32, i32, i32, i32) {
    %c0_i32 = arith.constant 0 : i32
    %c0_i32_0 = arith.constant 0 : i32
    %c0_i32_1 = arith.constant 0 : i32
    return %arg0, %arg1, %c0_i32, %c0_i32_0 : i32, i32, i32, i32
  }
  func.func @transform_4(%arg0: i32, %arg1: i32) -> (i32, i32, i32, i32) {
    %c0_i32 = arith.constant 0 : i32
    %c0_i32_0 = arith.constant 0 : i32
    %c0_i32_1 = arith.constant 0 : i32
    return %arg0, %arg1, %c0_i32, %c0_i32_0 : i32, i32, i32, i32
  }
}

</mosaic_0001>

<llo_original>
// kernel: deconv_bn_relu.1
$region0: #{deconv_bn_relu.1}
  #allocation0 [shape = 'u32[]', space=smem, size = 0x4, offset = 0x4, fixed_abs, tag = 'smem constant byte address 0x4 - core index']
  #allocation1 [shape = 'u32[144,128]{1,0:T(1,128)}', space=vmem, size = 0x12000, scoped, tag = 'internal scratch']
  %s0 = inlined_call_operand.vmem [shape: bf16[2,256,16], index: 0, kind: input, shape index: {}]
  %s1 = inlined_call_operand.vmem [shape: bf16[16,128], index: 1, kind: input, shape index: {}]
  %s2 = inlined_call_operand.vmem [shape: bf16[2,256,128], index: 2, kind: output, shape index: {0}]
  %s3 = inlined_call_operand.vmem [shape: f32[2,1,1,128], index: 3, kind: output, shape index: {1}]
  %s4 = inlined_call_operand.vmem [shape: f32[2,1,1,128], index: 4, kind: output, shape index: {2}]
  %5 = xla_tuple %s2, %s3, %s4
  %s6 = sld [smem:[#allocation0]]
  $region57: #{deconv_bn_relu.1} parent=0
    _
  %s8 = ssub.s32 1, %s6
  %s9 = scalar_select 0, %s8, %s6
  loop: start=0, step=1, limit=4
  $region2: #{deconv_bn_relu.1} parent=0 // loop_pre_header
    _
  $region3: #{deconv_bn_relu.1} parent=0 // loop_header
    %s11 = sphi 0, %s15
    %p12 = scmp.ge.s32.totalorder %s11, 4
    %s18 = sphi 0, %s30
    %s19 = sphi 0, %s26
    %s20 = sphi 0, %s18
    %s21 = sphi 0, %s19
    %s22 = sphi 0, %s20
    %s23 = sphi 0, %s21
    %s35 = sphi 0, %s37
    %s38 = sphi 0, %s35
    %s39 = sphi 0, %s38
    %s55 = sphi 0, %s39
    %s59 = sphi 0, %s59
    %s61 = sphi 0, %s59
    %s62 = sphi 0, %s61
    %s76 = sphi 0, %s62
    %s84 = sphi 0, %s86
    %s87 = sphi 0, %s84
    %s88 = sphi 0, %s87
    %s104 = sphi 0, %s88
    %s112 = sphi 0, %s114
    %s115 = sphi 0, %s112
    %s116 = sphi 0, %s115
    %s132 = sphi 0, %s116
    %s140 = sphi 0, %s142
    %s143 = sphi 0, %s140
    %s144 = sphi 0, %s143
    %s160 = sphi 0, %s144
  $region4: #{deconv_bn_relu.1} parent=0 // loop_header_branch
    %14 = sbr.rel (%p12) target = $region8
  $region5: #{deconv_bn_relu.1} parent=0 // loop_body
    %s16 = ssub.s32 %s11, 1
    %s17 = ssub.s32 %s11, 2
    %s24 = sadd.s32 1, %s19
    %p25 = scmp.ge.s32.totalorder %s24, 1
    %s26 = scalar_select %p25, 0, %s24
    %s27 = sadd.s32 1, %s18
    %s28 = scalar_select %p25, %s27, %s18
    %p29 = scmp.ge.s32.totalorder %s28, 2
    %s30 = scalar_select %p29, 0, %s28
    %s31 = ssub.s32 %s18, %s30
    %s32 = ssub.s32 %s19, %s26
    %s33 = sor.u32 %s31, %s32
    %p34 = scmp.eq.s32.totalorder %s33, 0
    %s36 = sadd.s32 %s35, 1
    %s37 = scalar_select %p34, %s35, %s36
    %p40 = pneg %p34
    %p41 = scmp.eq.s32.totalorder %s11, 1
    %p42 = por %p40, %p41
    %p43 = scmp.ne.s32.totalorder %s35, %s38
    %p44 = scmp.eq.s32.totalorder %s11, 0
    %p45 = por %p43, %p44
    %p46 = scmp.ne.s32.totalorder %s35, %s38
    %p47 = scmp.eq.s32.totalorder %s16, 1
    %p48 = por %p46, %p47
    %p49 = scmp.ne.s32.totalorder %s38, %s39
    %p50 = scmp.eq.s32.totalorder %s16, 0
    %p51 = por %p49, %p50
    %p52 = scmp.ne.s32.totalorder %s38, %s39
    %p53 = scmp.eq.s32.totalorder %s17, 1
    %p54 = por %p52, %p53
    %p56 = scmp.ne.s32.totalorder %s39, %s55
    %p57 = scmp.eq.s32.totalorder %s17, 0
    %p58 = por %p56, %p57
    %s60 = sadd.s32 %s59, 1
    %p63 = scmp.eq.s32.totalorder %s11, 1
    %p64 = scmp.ne.s32.totalorder %s59, %s61
    %p65 = scmp.eq.s32.totalorder %s11, 0
    %p66 = por %p64, %p65
    %p67 = scmp.ne.s32.totalorder %s59, %s61
    %p68 = scmp.eq.s32.totalorder %s16, 1
    %p69 = por %p67, %p68
    %p70 = scmp.ne.s32.totalorder %s61, %s62
    %p71 = scmp.eq.s32.totalorder %s16, 0
    %p72 = por %p70, %p71
    %p73 = scmp.ne.s32.totalorder %s61, %s62
    %p74 = scmp.eq.s32.totalorder %s17, 1
    %p75 = por %p73, %p74
    %p77 = scmp.ne.s32.totalorder %s62, %s76
    %p78 = scmp.eq.s32.totalorder %s17, 0
    %p79 = por %p77, %p78
    %s80 = ssub.s32 %s18, %s30
    %s81 = ssub.s32 %s19, %s26
    %s82 = sor.u32 %s80, %s81
    %p83 = scmp.eq.s32.totalorder %s82, 0
    %s85 = sadd.s32 %s84, 1
    %s86 = scalar_select %p83, %s84, %s85
    %p89 = pneg %p83
    %p90 = scmp.eq.s32.totalorder %s11, 1
    %p91 = por %p89, %p90
    %p92 = scmp.ne.s32.totalorder %s84, %s87
    %p93 = scmp.eq.s32.totalorder %s11, 0
    %p94 = por %p92, %p93
    %p95 = scmp.ne.s32.totalorder %s84, %s87
    %p96 = scmp.eq.s32.totalorder %s16, 1
    %p97 = por %p95, %p96
    %p98 = scmp.ne.s32.totalorder %s87, %s88
    %p99 = scmp.eq.s32.totalorder %s16, 0
    %p100 = por %p98, %p99
    %p101 = scmp.ne.s32.totalorder %s87, %s88
    %p102 = scmp.eq.s32.totalorder %s17, 1
    %p103 = por %p101, %p102
    %p105 = scmp.ne.s32.totalorder %s88, %s104
    %p106 = scmp.eq.s32.totalorder %s17, 0
    %p107 = por %p105, %p106
    %s108 = ssub.s32 %s18, %s30
    %s109 = ssub.s32 %s19, %s26
    %s110 = sor.u32 %s108, %s109
    %p111 = scmp.eq.s32.totalorder %s110, 0
    %s113 = sadd.s32 %s112, 1
    %s114 = scalar_select %p111, %s112, %s113
    %p117 = pneg %p111
    %p118 = scmp.eq.s32.totalorder %s11, 1
    %p119 = por %p117, %p118
    %p120 = scmp.ne.s32.totalorder %s112, %s115
    %p121 = scmp.eq.s32.totalorder %s11, 0
    %p122 = por %p120, %p121
    %p123 = scmp.ne.s32.totalorder %s112, %s115
    %p124 = scmp.eq.s32.totalorder %s16, 1
    %p125 = por %p123, %p124
    %p126 = scmp.ne.s32.totalorder %s115, %s116
    %p127 = scmp.eq.s32.totalorder %s16, 0
    %p128 = por %p126, %p127
    %p129 = scmp.ne.s32.totalorder %s115, %s116
    %p130 = scmp.eq.s32.totalorder %s17, 1
    %p131 = por %p129, %p130
    %p133 = scmp.ne.s32.totalorder %s116, %s132
    %p134 = scmp.eq.s32.totalorder %s17, 0
    %p135 = por %p133, %p134
    %s136 = ssub.s32 %s18, %s30
    %s137 = ssub.s32 %s19, %s26
    %s138 = sor.u32 %s136, %s137
    %p139 = scmp.eq.s32.totalorder %s138, 0
    %s141 = sadd.s32 %s140, 1
    %s142 = scalar_select %p139, %s140, %s141
    %p145 = pneg %p139
    %p146 = scmp.eq.s32.totalorder %s11, 1
    %p147 = por %p145, %p146
    %p148 = scmp.ne.s32.totalorder %s140, %s143
    %p149 = scmp.eq.s32.totalorder %s11, 0
    %p150 = por %p148, %p149
    %p151 = scmp.ne.s32.totalorder %s140, %s143
    %p152 = scmp.eq.s32.totalorder %s16, 1
    %p153 = por %p151, %p152
    %p154 = scmp.ne.s32.totalorder %s143, %s144
    %p155 = scmp.eq.s32.totalorder %s16, 0
    %p156 = por %p154, %p155
    %p157 = scmp.ne.s32.totalorder %s143, %s144
    %p158 = scmp.eq.s32.totalorder %s17, 1
    %p159 = por %p157, %p158
    %p161 = scmp.ne.s32.totalorder %s144, %s160
    %p162 = scmp.eq.s32.totalorder %s17, 0
    %p163 = por %p161, %p162
    %p164 = scmp.le.s32.totalorder 1, %s11
    %p165 = scmp.lt.s32.totalorder %s11, 3
    %p166 = pnand %p164, %p165
    %p167 = pneg %p166
    // Predicated region
    $region9: #{deconv_bn_relu.1} parent=5 // pred_check
      _
    $region10: #{deconv_bn_relu.1} parent=5 // pred_check_branch
      %169 = sbr.rel (%p166) target = $region12
    $region11: #{deconv_bn_relu.1} parent=5 // pred_region
      %s170 = ssub.s32 %s11, 1
      // Predicated region
      $region13: #{deconv_bn_relu.1} parent=11 // pred_check
        %p171 = pneg %p72
      $region14: #{deconv_bn_relu.1} parent=11 // pred_check_branch
        %173 = sbr.rel (%p171) target = $region16
      $region15: #{deconv_bn_relu.1} parent=11 // pred_region
        _
      $region16: #{deconv_bn_relu.1} parent=11 // pred_fallthru
        _
    $region12: #{deconv_bn_relu.1} parent=5 // pred_fallthru
      _
    %p174 = scmp.lt.s32.totalorder %s11, 2
    // Predicated region
    $region17: #{deconv_bn_relu.1} parent=5 // pred_check
      %p175 = pneg %p174
    $region18: #{deconv_bn_relu.1} parent=5 // pred_check_branch
      %177 = sbr.rel (%p175) target = $region20
    $region19: #{deconv_bn_relu.1} parent=5 // pred_region
      // Predicated region
      $region21: #{deconv_bn_relu.1} parent=19 // pred_check
        %p178 = pneg %p45
      $region22: #{deconv_bn_relu.1} parent=19 // pred_check_branch
        %180 = sbr.rel (%p178) target = $region24
      $region23: #{deconv_bn_relu.1} parent=19 // pred_region
        %s181 = smul.u32 32, %s19
        %p182 = scmp.lt.s32.totalorder %s18, 1
        %s183 = scalar_select %p182, %s18, 1
        %p184 = scmp.lt.s32.totalorder %s181, 31
        %s185 = scalar_select %p184, %s181, 31
        %s186 = smul.addr %s183, 32
        %s187 = sadd.s32 %s185, %s186
        %s188 = smul.addr %s187, 4
        %s189 = scalar_lea.vmem %s0, %s188
        %s190 = smul.u32 32, %s19
      $region24: #{deconv_bn_relu.1} parent=19 // pred_fallthru
        _
    $region20: #{deconv_bn_relu.1} parent=5 // pred_fallthru
      _
    %p191 = scmp.le.s32.totalorder 1, %s11
    %p192 = scmp.lt.s32.totalorder %s11, 3
    %p193 = pnand %p191, %p192
    %p194 = pneg %p193
    // Predicated region
    $region25: #{deconv_bn_relu.1} parent=5 // pred_check
      _
    $region26: #{deconv_bn_relu.1} parent=5 // pred_check_branch
      %196 = sbr.rel (%p193) target = $region28
    $region27: #{deconv_bn_relu.1} parent=5 // pred_region
      %s197 = ssub.s32 %s11, 1
      %s198 = smul.u32 32, %s21
      %p199 = scmp.lt.s32.totalorder %s20, 1
      %s200 = scalar_select %p199, %s20, 1
      %p201 = scmp.lt.s32.totalorder %s198, 31
      %s202 = scalar_select %p201, %s198, 31
      %s203 = smul.addr %s200, 32
      %s204 = sadd.s32 %s202, %s203
      %s205 = smul.addr %s204, 4
      %s206 = scalar_lea.vmem %s0, %s205
      %p207 = pneg %p51
      %p208 = pneg %p48
      %p209 = pneg %p72
      %p210 = pneg %p69
      %p211 = pneg %p100
      %p212 = pneg %p97
      %s213 = smul.u32 32, %s21
      %p214 = scmp.lt.s32.totalorder %s20, 1
      %s215 = scalar_select %p214, %s20, 1
      %p216 = scmp.lt.s32.totalorder %s213, 31
      %s217 = scalar_select %p216, %s213, 31
      %s218 = smul.addr %s215, 32
      %s219 = sadd.s32 %s217, %s218
      %s220 = smul.addr %s219, 4
      %s221 = scalar_lea.vmem %s2, %s220
      %p222 = pneg %p128
      %p223 = pneg %p125
      %p224 = scmp.lt.s32.totalorder %s20, 1
      %s225 = scalar_select %p224, %s20, 1
      %p226 = scmp.lt.s32.totalorder %s21, 0
      %s227 = scalar_select %p226, %s21, 0
      %s228 = sadd.s32 %s227, %s225
      %s229 = scalar_lea.vmem %s3, %s228
      %p230 = pneg %p156
      %p231 = pneg %p153
      %p232 = scmp.lt.s32.totalorder %s20, 1
      %s233 = scalar_select %p232, %s20, 1
      %p234 = scmp.lt.s32.totalorder %s21, 0
      %s235 = scalar_select %p234, %s21, 0
      %s236 = sadd.s32 %s235, %s233
      %s237 = scalar_lea.vmem %s4, %s236
      %s238 = smul.u32 32, %s21
      %p239 = scmp.lt.s32.totalorder %s20, 1
      %s240 = scalar_select %p239, %s20, 1
      %p241 = scmp.lt.s32.totalorder %s238, 31
      %s242 = scalar_select %p241, %s238, 31
      %s243 = smul.addr %s240, 32
      %s244 = sadd.s32 %s242, %s243
      %s245 = smul.addr %s244, 4
      %s246 = scalar_lea.vmem %s0, %s245
      %s247 = smul.u32 32, %s21
      %s248 = smul.u32 32, %s21
      %p249 = scmp.lt.s32.totalorder %s20, 1
      %s250 = scalar_select %p249, %s20, 1
      %p251 = scmp.lt.s32.totalorder %s248, 31
      %s252 = scalar_select %p251, %s248, 31
      %s253 = smul.addr %s250, 32
      %s254 = sadd.s32 %s252, %s253
      %s255 = smul.addr %s254, 4
      %s256 = scalar_lea.vmem %s2, %s255
      %s257 = smul.u32 32, %s21
      %p258 = scmp.lt.s32.totalorder %s20, 1
      %s259 = scalar_select %p258, %s20, 1
      %p260 = scmp.lt.s32.totalorder %s21, 0
      %s261 = scalar_select %p260, %s21, 0
      %s262 = sadd.s32 %s261, %s259
      %s263 = scalar_lea.vmem %s3, %s262
      %p264 = scmp.lt.s32.totalorder %s20, 1
      %s265 = scalar_select %p264, %s20, 1
      %p266 = scmp.lt.s32.totalorder %s21, 0
      %s267 = scalar_select %p266, %s21, 0
      %s268 = sadd.s32 %s267, %s265
      %s269 = scalar_lea.vmem %s4, %s268
      %v271 = vld [vmem:[%s246] sm:$0xf]
      %v272 = vld [vmem:[%s246 + $0x4] sm:$0xf]
      %v273 = vld [vmem:[%s246 + $0x8] sm:$0xf]
      %v274 = vld [vmem:[%s246 + $0xc] sm:$0xf]
      %v275 = vld [vmem:[%s246 + $0x10] sm:$0xf]
      %v276 = vld [vmem:[%s246 + $0x14] sm:$0xf]
      %v277 = vld [vmem:[%s246 + $0x18] sm:$0xf]
      %v278 = vld [vmem:[%s246 + $0x1c] sm:$0xf]
      %v279 = vld [vmem:[%s246 + $0x20] sm:$0xf]
      %v280 = vld [vmem:[%s246 + $0x24] sm:$0xf]
      %v281 = vld [vmem:[%s246 + $0x28] sm:$0xf]
      %v282 = vld [vmem:[%s246 + $0x2c] sm:$0xf]
      %v283 = vld [vmem:[%s246 + $0x30] sm:$0xf]
      %v284 = vld [vmem:[%s246 + $0x34] sm:$0xf]
      %v285 = vld [vmem:[%s246 + $0x38] sm:$0xf]
      %v286 = vld [vmem:[%s246 + $0x3c] sm:$0xf]
      %v287 = vld [vmem:[%s246 + $0x40] sm:$0xf]
      %v288 = vld [vmem:[%s246 + $0x44] sm:$0xf]
      %v289 = vld [vmem:[%s246 + $0x48] sm:$0xf]
      %v290 = vld [vmem:[%s246 + $0x4c] sm:$0xf]
      %v291 = vld [vmem:[%s246 + $0x50] sm:$0xf]
      %v292 = vld [vmem:[%s246 + $0x54] sm:$0xf]
      %v293 = vld [vmem:[%s246 + $0x58] sm:$0xf]
      %v294 = vld [vmem:[%s246 + $0x5c] sm:$0xf]
      %v295 = vld [vmem:[%s246 + $0x60] sm:$0xf]
      %v296 = vld [vmem:[%s246 + $0x64] sm:$0xf]
      %v297 = vld [vmem:[%s246 + $0x68] sm:$0xf]
      %v298 = vld [vmem:[%s246 + $0x6c] sm:$0xf]
      %v299 = vld [vmem:[%s246 + $0x70] sm:$0xf]
      %v300 = vld [vmem:[%s246 + $0x74] sm:$0xf]
      %v301 = vld [vmem:[%s246 + $0x78] sm:$0xf]
      %v302 = vld [vmem:[%s246 + $0x7c] sm:$0xf]
      %v303 = vld [vmem:[%s1] sm:$0xf]
      %v304 = vld [vmem:[%s1 + $0x4] sm:$0xf]
      %v337 = vunpack.c.l.b16 %v271
      %v338 = vunpack.c.l.b16 %v272
      %v339 = vunpack.c.l.b16 %v273
      %v340 = vunpack.c.l.b16 %v274
      %v341 = vunpack.c.l.b16 %v275
      %v342 = vunpack.c.l.b16 %v276
      %v343 = vunpack.c.l.b16 %v277
      %v344 = vunpack.c.l.b16 %v278
      %v345 = vunpack.c.l.b16 %v279
      %v346 = vunpack.c.l.b16 %v280
      %v347 = vunpack.c.l.b16 %v281
      %v348 = vunpack.c.l.b16 %v282
      %v349 = vunpack.c.l.b16 %v283
      %v350 = vunpack.c.l.b16 %v284
      %v351 = vunpack.c.l.b16 %v285
      %v352 = vunpack.c.l.b16 %v286
      %v353 = vunpack.c.l.b16 %v287
      %v354 = vunpack.c.l.b16 %v288
      %v355 = vunpack.c.l.b16 %v289
      %v356 = vunpack.c.l.b16 %v290
      %v357 = vunpack.c.l.b16 %v291
      %v358 = vunpack.c.l.b16 %v292
      %v359 = vunpack.c.l.b16 %v293
      %v360 = vunpack.c.l.b16 %v294
      %v361 = vunpack.c.l.b16 %v295
      %v362 = vunpack.c.l.b16 %v296
      %v363 = vunpack.c.l.b16 %v297
      %v364 = vunpack.c.l.b16 %v298
      %v365 = vunpack.c.l.b16 %v299
      %v366 = vunpack.c.l.b16 %v300
      %v367 = vunpack.c.l.b16 %v301
      %v368 = vunpack.c.l.b16 %v302
      %v369 = vpack.c.b16 %v338, %v337
      %v370 = vpack.c.b16 %v340, %v339
      %v371 = vpack.c.b16 %v342, %v341
      %v372 = vpack.c.b16 %v344, %v343
      %v373 = vpack.c.b16 %v346, %v345
      %v374 = vpack.c.b16 %v348, %v347
      %v375 = vpack.c.b16 %v350, %v349
      %v376 = vpack.c.b16 %v352, %v351
      %v377 = vpack.c.b16 %v354, %v353
      %v378 = vpack.c.b16 %v356, %v355
      %v379 = vpack.c.b16 %v358, %v357
      %v380 = vpack.c.b16 %v360, %v359
      %v381 = vpack.c.b16 %v362, %v361
      %v382 = vpack.c.b16 %v364, %v363
      %v383 = vpack.c.b16 %v366, %v365
      %v384 = vpack.c.b16 %v368, %v367
      %v387 = vunpack.c.l.b16 %v303
      %v388 = vunpack.c.l.b16 %v304
      %v389 = vpack.c.b16 %v388, %v387
      %vm391 = vcmask 130048
      %v393 = vsel %vm391, %v369, 0
      %v396 = vsel %vm391, %v370, 0
      %v399 = vsel %vm391, %v371, 0
      %v402 = vsel %vm391, %v372, 0
      %v405 = vsel %vm391, %v373, 0
      %v408 = vsel %vm391, %v374, 0
      %v411 = vsel %vm391, %v375, 0
      %v414 = vsel %vm391, %v376, 0
      %v417 = vsel %vm391, %v377, 0
      %v420 = vsel %vm391, %v378, 0
      %v423 = vsel %vm391, %v379, 0
      %v426 = vsel %vm391, %v380, 0
      %v429 = vsel %vm391, %v381, 0
      %v432 = vsel %vm391, %v382, 0
      %v435 = vsel %vm391, %v383, 0
      %v438 = vsel %vm391, %v384, 0
      %440 = vmatprep.subr.bf16.mxu0 0
      %441 = vmatpush1.bf16.msra.mxu0 0
      %442 = vmatprep.subr.bf16.mxu0 0
      %443 = vmatpush1.bf16.msra.mxu0 0
      %444 = vmatprep.subr.bf16.mxu0 0
      %445 = vmatpush1.bf16.msra.mxu0 0
      %446 = vmatprep.subr.bf16.mxu0 0
      %447 = vmatpush1.bf16.msra.mxu0 0
      %448 = vmatprep.subr.bf16.mxu0 0
      %449 = vmatpush1.bf16.msra.mxu0 0
      %450 = vmatprep.subr.bf16.mxu0 0
      %451 = vmatpush1.bf16.msra.mxu0 0
      %452 = vmatprep.subr.bf16.mxu0 0
      %453 = vmatpush1.bf16.msra.mxu0 0
      %454 = vmatprep.subr.bf16.mxu0 0
      %455 = vmatpush1.bf16.msra.mxu0 %v389
      %456 = vmatprep.subr.bf16.mxu0 0
      %457 = vmatpush2.bf16.msra.mxu0 0
      %458 = vmatprep.subr.bf16.mxu0 0
      %459 = vmatpush2.bf16.msra.mxu0 0
      %460 = vmatprep.subr.bf16.mxu0 0
      %461 = vmatpush2.bf16.msra.mxu0 0
      %462 = vmatprep.subr.bf16.mxu0 0
      %463 = vmatpush2.bf16.msra.mxu0 0
      %464 = vmatprep.subr.bf16.mxu0 0
      %465 = vmatpush2.bf16.msra.mxu0 0
      %466 = vmatprep.subr.bf16.mxu0 0
      %467 = vmatpush2.bf16.msra.mxu0 0
      %468 = vmatprep.subr.bf16.mxu0 0
      %469 = vmatpush2.bf16.msra.mxu0 0
      %470 = vmatprep.subr.bf16.mxu0 0
      %471 = vmatpush2.bf16.msra.mxu0 0
      %472 = vmatprep.mubr.bf16.mxu0 0
      %473 = vmatmul.mubr.bf16.gmra.mxu0 %v393
      %v474 = vpop.f32.mrf.mxu0
      %v475 = vadd.f32 0.0, %v474
      %v476 = vpop.f32.mrf.mxu0
      %v477 = vpop.f32.mrf.mxu0
      %v478 = vadd.f32 0.0, %v477
      %v479 = vpop.f32.mrf.mxu0
      %480 = vmatprep.mubr.bf16.mxu0 0
      %481 = vmatmul.mubr.bf16.gmra.mxu0 %v396
      %v482 = vpop.f32.mrf.mxu0
      %v483 = vadd.f32 0.0, %v482
      %v484 = vpop.f32.mrf.mxu0
      %v485 = vpop.f32.mrf.mxu0
      %v486 = vadd.f32 0.0, %v485
      %v487 = vpop.f32.mrf.mxu0
      %488 = vmatprep.mubr.bf16.mxu0 0
      %489 = vmatmul.mubr.bf16.gmra.mxu0 %v399
      %v490 = vpop.f32.mrf.mxu0
      %v491 = vadd.f32 0.0, %v490
      %v492 = vpop.f32.mrf.mxu0
      %v493 = vpop.f32.mrf.mxu0
      %v494 = vadd.f32 0.0, %v493
      %v495 = vpop.f32.mrf.mxu0
      %496 = vmatprep.mubr.bf16.mxu0 0
      %497 = vmatmul.mubr.bf16.gmra.mxu0 %v402
      %v498 = vpop.f32.mrf.mxu0
      %v499 = vadd.f32 0.0, %v498
      %v500 = vpop.f32.mrf.mxu0
      %v501 = vpop.f32.mrf.mxu0
      %v502 = vadd.f32 0.0, %v501
      %v503 = vpop.f32.mrf.mxu0
      %504 = vmatprep.mubr.bf16.mxu0 0
      %505 = vmatmul.mubr.bf16.gmra.mxu0 %v405
      %v506 = vpop.f32.mrf.mxu0
      %v507 = vadd.f32 0.0, %v506
      %v508 = vpop.f32.mrf.mxu0
      %v509 = vpop.f32.mrf.mxu0
      %v510 = vadd.f32 0.0, %v509
      %v511 = vpop.f32.mrf.mxu0
      %512 = vmatprep.mubr.bf16.mxu0 0
      %513 = vmatmul.mubr.bf16.gmra.mxu0 %v408
      %v514 = vpop.f32.mrf.mxu0
      %v515 = vadd.f32 0.0, %v514
      %v516 = vpop.f32.mrf.mxu0
      %v517 = vpop.f32.mrf.mxu0
      %v518 = vadd.f32 0.0, %v517
      %v519 = vpop.f32.mrf.mxu0
      %520 = vmatprep.mubr.bf16.mxu0 0
      %521 = vmatmul.mubr.bf16.gmra.mxu0 %v411
      %v522 = vpop.f32.mrf.mxu0
      %v523 = vadd.f32 0.0, %v522
      %v524 = vpop.f32.mrf.mxu0
      %v525 = vpop.f32.mrf.mxu0
      %v526 = vadd.f32 0.0, %v525
      %v527 = vpop.f32.mrf.mxu0
      %528 = vmatprep.mubr.bf16.mxu0 0
      %529 = vmatmul.mubr.bf16.gmra.mxu0 %v414
      %v530 = vpop.f32.mrf.mxu0
      %v531 = vadd.f32 0.0, %v530
      %v532 = vpop.f32.mrf.mxu0
      %v533 = vpop.f32.mrf.mxu0
      %v534 = vadd.f32 0.0, %v533
      %v535 = vpop.f32.mrf.mxu0
      %536 = vmatprep.mubr.bf16.mxu0 0
      %537 = vmatmul.mubr.bf16.gmra.mxu0 %v417
      %v538 = vpop.f32.mrf.mxu0
      %v539 = vadd.f32 0.0, %v538
      %v540 = vpop.f32.mrf.mxu0
      %v541 = vpop.f32.mrf.mxu0
      %v542 = vadd.f32 0.0, %v541
      %v543 = vpop.f32.mrf.mxu0
      %544 = vmatprep.mubr.bf16.mxu0 0
      %545 = vmatmul.mubr.bf16.gmra.mxu0 %v420
      %v546 = vpop.f32.mrf.mxu0
      %v547 = vadd.f32 0.0, %v546
      %v548 = vpop.f32.mrf.mxu0
      %v549 = vpop.f32.mrf.mxu0
      %v550 = vadd.f32 0.0, %v549
      %v551 = vpop.f32.mrf.mxu0
      %552 = vmatprep.mubr.bf16.mxu0 0
      %553 = vmatmul.mubr.bf16.gmra.mxu0 %v423
      %v554 = vpop.f32.mrf.mxu0
      %v555 = vadd.f32 0.0, %v554
      %v556 = vpop.f32.mrf.mxu0
      %v557 = vpop.f32.mrf.mxu0
      %v558 = vadd.f32 0.0, %v557
      %v559 = vpop.f32.mrf.mxu0
      %560 = vmatprep.mubr.bf16.mxu0 0
      %561 = vmatmul.mubr.bf16.gmra.mxu0 %v426
      %v562 = vpop.f32.mrf.mxu0
      %v563 = vadd.f32 0.0, %v562
      %v564 = vpop.f32.mrf.mxu0
      %v565 = vpop.f32.mrf.mxu0
      %v566 = vadd.f32 0.0, %v565
      %v567 = vpop.f32.mrf.mxu0
      %568 = vmatprep.mubr.bf16.mxu0 0
      %569 = vmatmul.mubr.bf16.gmra.mxu0 %v429
      %v570 = vpop.f32.mrf.mxu0
      %v571 = vadd.f32 0.0, %v570
      %v572 = vpop.f32.mrf.mxu0
      %v573 = vpop.f32.mrf.mxu0
      %v574 = vadd.f32 0.0, %v573
      %v575 = vpop.f32.mrf.mxu0
      %576 = vmatprep.mubr.bf16.mxu0 0
      %577 = vmatmul.mubr.bf16.gmra.mxu0 %v432
      %v578 = vpop.f32.mrf.mxu0
      %v579 = vadd.f32 0.0, %v578
      %v580 = vpop.f32.mrf.mxu0
      %v581 = vpop.f32.mrf.mxu0
      %v582 = vadd.f32 0.0, %v581
      %v583 = vpop.f32.mrf.mxu0
      %584 = vmatprep.mubr.bf16.mxu0 0
      %585 = vmatmul.mubr.bf16.gmra.mxu0 %v435
      %v586 = vpop.f32.mrf.mxu0
      %v587 = vadd.f32 0.0, %v586
      %v588 = vpop.f32.mrf.mxu0
      %v589 = vpop.f32.mrf.mxu0
      %v590 = vadd.f32 0.0, %v589
      %v591 = vpop.f32.mrf.mxu0
      %592 = vmatprep.mubr.bf16.mxu0 0
      %593 = vmatmul.mubr.bf16.gmra.mxu0 %v438
      %v594 = vpop.f32.mrf.mxu0
      %v595 = vadd.f32 0.0, %v594
      %v596 = vpop.f32.mrf.mxu0
      %v597 = vpop.f32.mrf.mxu0
      %v598 = vadd.f32 0.0, %v597
      %v599 = vpop.f32.mrf.mxu0
      %600 = vdwg.mxu0
      %v601 = vadd.f32 %v475, %v478
      %v602 = vadd.f32 %v601, %v483
      %v603 = vadd.f32 %v602, %v486
      %v604 = vadd.f32 %v603, %v491
      %v605 = vadd.f32 %v604, %v494
      %v606 = vadd.f32 %v605, %v499
      %v607 = vadd.f32 %v606, %v502
      %v608 = vadd.f32 %v607, %v507
      %v609 = vadd.f32 %v608, %v510
      %v610 = vadd.f32 %v609, %v515
      %v611 = vadd.f32 %v610, %v518
      %v612 = vadd.f32 %v611, %v523
      %v613 = vadd.f32 %v612, %v526
      %v614 = vadd.f32 %v613, %v531
      %v615 = vadd.f32 %v614, %v534
      %v616 = vadd.f32 %v615, %v539
      %v617 = vadd.f32 %v616, %v542
      %v618 = vadd.f32 %v617, %v547
      %v619 = vadd.f32 %v618, %v550
      %v620 = vadd.f32 %v619, %v555
      %v621 = vadd.f32 %v620, %v558
      %v622 = vadd.f32 %v621, %v563
      %v623 = vadd.f32 %v622, %v566
      %v624 = vadd.f32 %v623, %v571
      %v625 = vadd.f32 %v624, %v574
      %v626 = vadd.f32 %v625, %v579
      %v627 = vadd.f32 %v626, %v582
      %v628 = vadd.f32 %v627, %v587
      %v629 = vadd.f32 %v628, %v590
      %v630 = vadd.f32 %v629, %v595
      %v631 = vadd.f32 %v630, %v598
      %v632 = vrot.slane %v631, 4
      %v633 = vadd.f32 %v631, %v632
      %v634 = vrot.slane %v633, 2
      %v635 = vadd.f32 %v633, %v634
      %v636 = vrot.slane %v635, 1
      %v637 = vadd.f32 %v635, %v636
      %638 = vst [vmem:[%s263] sm:$0x1] %v637
      %v639 = vmul.f32 %v475, %v475
      %v640 = vmul.f32 %v478, %v478
      %v641 = vmul.f32 %v483, %v483
      %v642 = vmul.f32 %v486, %v486
      %v643 = vmul.f32 %v491, %v491
      %v644 = vmul.f32 %v494, %v494
      %v645 = vmul.f32 %v499, %v499
      %v646 = vmul.f32 %v502, %v502
      %v647 = vmul.f32 %v507, %v507
      %v648 = vmul.f32 %v510, %v510
      %v649 = vmul.f32 %v515, %v515
      %v650 = vmul.f32 %v518, %v518
      %v651 = vmul.f32 %v523, %v523
      %v652 = vmul.f32 %v526, %v526
      %v653 = vmul.f32 %v531, %v531
      %v654 = vmul.f32 %v534, %v534
      %v655 = vmul.f32 %v539, %v539
      %v656 = vmul.f32 %v542, %v542
      %v657 = vmul.f32 %v547, %v547
      %v658 = vmul.f32 %v550, %v550
      %v659 = vmul.f32 %v555, %v555
      %v660 = vmul.f32 %v558, %v558
      %v661 = vmul.f32 %v563, %v563
      %v662 = vmul.f32 %v566, %v566
      %v663 = vmul.f32 %v571, %v571
      %v664 = vmul.f32 %v574, %v574
      %v665 = vmul.f32 %v579, %v579
      %v666 = vmul.f32 %v582, %v582
      %v667 = vmul.f32 %v587, %v587
      %v668 = vmul.f32 %v590, %v590
      %v669 = vmul.f32 %v595, %v595
      %v670 = vmul.f32 %v598, %v598
      %v671 = vadd.f32 %v639, %v640
      %v672 = vadd.f32 %v671, %v641
      %v673 = vadd.f32 %v672, %v642
      %v674 = vadd.f32 %v673, %v643
      %v675 = vadd.f32 %v674, %v644
      %v676 = vadd.f32 %v675, %v645
      %v677 = vadd.f32 %v676, %v646
      %v678 = vadd.f32 %v677, %v647
      %v679 = vadd.f32 %v678, %v648
      %v680 = vadd.f32 %v679, %v649
      %v681 = vadd.f32 %v680, %v650
      %v682 = vadd.f32 %v681, %v651
      %v683 = vadd.f32 %v682, %v652
      %v684 = vadd.f32 %v683, %v653
      %v685 = vadd.f32 %v684, %v654
      %v686 = vadd.f32 %v685, %v655
      %v687 = vadd.f32 %v686, %v656
      %v688 = vadd.f32 %v687, %v657
      %v689 = vadd.f32 %v688, %v658
      %v690 = vadd.f32 %v689, %v659
      %v691 = vadd.f32 %v690, %v660
      %v692 = vadd.f32 %v691, %v661
      %v693 = vadd.f32 %v692, %v662
      %v694 = vadd.f32 %v693, %v663
      %v695 = vadd.f32 %v694, %v664
      %v696 = vadd.f32 %v695, %v665
      %v697 = vadd.f32 %v696, %v666
      %v698 = vadd.f32 %v697, %v667
      %v699 = vadd.f32 %v698, %v668
      %v700 = vadd.f32 %v699, %v669
      %v701 = vadd.f32 %v700, %v670
      %v702 = vrot.slane %v701, 4
      %v703 = vadd.f32 %v701, %v702
      %v704 = vrot.slane %v703, 2
      %v705 = vadd.f32 %v703, %v704
      %v706 = vrot.slane %v705, 1
      %v707 = vadd.f32 %v705, %v706
      %708 = vst [vmem:[%s269] sm:$0x1] %v707
      %v709 = vpack.c.bf16 %v478, %v475
      %v710 = vpack.c.bf16 %v486, %v483
      %v711 = vpack.c.bf16 %v494, %v491
      %v712 = vpack.c.bf16 %v502, %v499
      %v713 = vpack.c.bf16 %v510, %v507
      %v714 = vpack.c.bf16 %v518, %v515
      %v715 = vpack.c.bf16 %v526, %v523
      %v716 = vpack.c.bf16 %v534, %v531
      %v717 = vpack.c.bf16 %v542, %v539
      %v718 = vpack.c.bf16 %v550, %v547
      %v719 = vpack.c.bf16 %v558, %v555
      %v720 = vpack.c.bf16 %v566, %v563
      %v721 = vpack.c.bf16 %v574, %v571
      %v722 = vpack.c.bf16 %v582, %v579
      %v723 = vpack.c.bf16 %v590, %v587
      %v724 = vpack.c.bf16 %v598, %v595
      %v741 = vunpack.c.l.b16 %v709
      %v742 = vunpack.c.h.b16 %v709
      %v743 = vunpack.c.l.b16 %v710
      %v744 = vunpack.c.h.b16 %v710
      %v745 = vunpack.c.l.b16 %v711
      %v746 = vunpack.c.h.b16 %v711
      %v747 = vunpack.c.l.b16 %v712
      %v748 = vunpack.c.h.b16 %v712
      %v749 = vunpack.c.l.b16 %v713
      %v750 = vunpack.c.h.b16 %v713
      %v751 = vunpack.c.l.b16 %v714
      %v752 = vunpack.c.h.b16 %v714
      %v753 = vunpack.c.l.b16 %v715
      %v754 = vunpack.c.h.b16 %v715
      %v755 = vunpack.c.l.b16 %v716
      %v756 = vunpack.c.h.b16 %v716
      %v757 = vunpack.c.l.b16 %v717
      %v758 = vunpack.c.h.b16 %v717
      %v759 = vunpack.c.l.b16 %v718
      %v760 = vunpack.c.h.b16 %v718
      %v761 = vunpack.c.l.b16 %v719
      %v762 = vunpack.c.h.b16 %v719
      %v763 = vunpack.c.l.b16 %v720
      %v764 = vunpack.c.h.b16 %v720
      %v765 = vunpack.c.l.b16 %v721
      %v766 = vunpack.c.h.b16 %v721
      %v767 = vunpack.c.l.b16 %v722
      %v768 = vunpack.c.h.b16 %v722
      %v769 = vunpack.c.l.b16 %v723
      %v770 = vunpack.c.h.b16 %v723
      %v771 = vunpack.c.l.b16 %v724
      %v772 = vunpack.c.h.b16 %v724
      %v773 = vpack.c.b16 %v741, %v741
      %v774 = vpack.c.b16 %v742, %v742
      %v775 = vpack.c.b16 %v743, %v743
      %v776 = vpack.c.b16 %v744, %v744
      %v777 = vpack.c.b16 %v745, %v745
      %v778 = vpack.c.b16 %v746, %v746
      %v779 = vpack.c.b16 %v747, %v747
      %v780 = vpack.c.b16 %v748, %v748
      %v781 = vpack.c.b16 %v749, %v749
      %v782 = vpack.c.b16 %v750, %v750
      %v783 = vpack.c.b16 %v751, %v751
      %v784 = vpack.c.b16 %v752, %v752
      %v785 = vpack.c.b16 %v753, %v753
      %v786 = vpack.c.b16 %v754, %v754
      %v787 = vpack.c.b16 %v755, %v755
      %v788 = vpack.c.b16 %v756, %v756
      %v789 = vpack.c.b16 %v757, %v757
      %v790 = vpack.c.b16 %v758, %v758
      %v791 = vpack.c.b16 %v759, %v759
      %v792 = vpack.c.b16 %v760, %v760
      %v793 = vpack.c.b16 %v761, %v761
      %v794 = vpack.c.b16 %v762, %v762
      %v795 = vpack.c.b16 %v763, %v763
      %v796 = vpack.c.b16 %v764, %v764
      %v797 = vpack.c.b16 %v765, %v765
      %v798 = vpack.c.b16 %v766, %v766
      %v799 = vpack.c.b16 %v767, %v767
      %v800 = vpack.c.b16 %v768, %v768
      %v801 = vpack.c.b16 %v769, %v769
      %v802 = vpack.c.b16 %v770, %v770
      %v803 = vpack.c.b16 %v771, %v771
      %v804 = vpack.c.b16 %v772, %v772
      %837 = vst [vmem:[%s256] sm:$0xf] %v773
      %838 = vst [vmem:[%s256 + $0x4] sm:$0xf] %v774
      %839 = vst [vmem:[%s256 + $0x8] sm:$0xf] %v775
      %840 = vst [vmem:[%s256 + $0xc] sm:$0xf] %v776
      %841 = vst [vmem:[%s256 + $0x10] sm:$0xf] %v777
      %842 = vst [vmem:[%s256 + $0x14] sm:$0xf] %v778
      %843 = vst [vmem:[%s256 + $0x18] sm:$0xf] %v779
      %844 = vst [vmem:[%s256 + $0x1c] sm:$0xf] %v780
      %845 = vst [vmem:[%s256 + $0x20] sm:$0xf] %v781
      %846 = vst [vmem:[%s256 + $0x24] sm:$0xf] %v782
      %847 = vst [vmem:[%s256 + $0x28] sm:$0xf] %v783
      %848 = vst [vmem:[%s256 + $0x2c] sm:$0xf] %v784
      %849 = vst [vmem:[%s256 + $0x30] sm:$0xf] %v785
      %850 = vst [vmem:[%s256 + $0x34] sm:$0xf] %v786
      %851 = vst [vmem:[%s256 + $0x38] sm:$0xf] %v787
      %852 = vst [vmem:[%s256 + $0x3c] sm:$0xf] %v788
      %853 = vst [vmem:[%s256 + $0x40] sm:$0xf] %v789
      %854 = vst [vmem:[%s256 + $0x44] sm:$0xf] %v790
      %855 = vst [vmem:[%s256 + $0x48] sm:$0xf] %v791
      %856 = vst [vmem:[%s256 + $0x4c] sm:$0xf] %v792
      %857 = vst [vmem:[%s256 + $0x50] sm:$0xf] %v793
      %858 = vst [vmem:[%s256 + $0x54] sm:$0xf] %v794
      %859 = vst [vmem:[%s256 + $0x58] sm:$0xf] %v795
      %860 = vst [vmem:[%s256 + $0x5c] sm:$0xf] %v796
      %861 = vst [vmem:[%s256 + $0x60] sm:$0xf] %v797
      %862 = vst [vmem:[%s256 + $0x64] sm:$0xf] %v798
      %863 = vst [vmem:[%s256 + $0x68] sm:$0xf] %v799
      %864 = vst [vmem:[%s256 + $0x6c] sm:$0xf] %v800
      %865 = vst [vmem:[%s256 + $0x70] sm:$0xf] %v801
      %866 = vst [vmem:[%s256 + $0x74] sm:$0xf] %v802
      %867 = vst [vmem:[%s256 + $0x78] sm:$0xf] %v803
      %868 = vst [vmem:[%s256 + $0x7c] sm:$0xf] %v804
      %s869 = smul.u32 32, %s21
      %p870 = scmp.lt.s32.totalorder %s20, 1
      %s871 = scalar_select %p870, %s20, 1
      %p872 = scmp.lt.s32.totalorder %s869, 31
      %s873 = scalar_select %p872, %s869, 31
      %s874 = smul.addr %s871, 32
      %s875 = sadd.s32 %s873, %s874
      %s876 = smul.addr %s875, 4
      %s877 = scalar_lea.vmem %s2, %s876
      %p878 = scmp.lt.s32.totalorder %s20, 1
      %s879 = scalar_select %p878, %s20, 1
      %p880 = scmp.lt.s32.totalorder %s21, 0
      %s881 = scalar_select %p880, %s21, 0
      %s882 = sadd.s32 %s881, %s879
      %s883 = scalar_lea.vmem %s3, %s882
      %p884 = scmp.lt.s32.totalorder %s20, 1
      %s885 = scalar_select %p884, %s20, 1
      %p886 = scmp.lt.s32.totalorder %s21, 0
      %s887 = scalar_select %p886, %s21, 0
      %s888 = sadd.s32 %s887, %s885
      %s889 = scalar_lea.vmem %s4, %s888
      // Predicated region
      $region29: #{deconv_bn_relu.1} parent=27 // pred_check
        %p890 = pneg %p97
      $region30: #{deconv_bn_relu.1} parent=27 // pred_check_branch
        %892 = sbr.rel (%p890) target = $region32
      $region31: #{deconv_bn_relu.1} parent=27 // pred_region
        %s893 = smul.u32 32, %s21
      $region32: #{deconv_bn_relu.1} parent=27 // pred_fallthru
        _
      // Predicated region
      $region33: #{deconv_bn_relu.1} parent=27 // pred_check
        %p894 = pneg %p125
      $region34: #{deconv_bn_relu.1} parent=27 // pred_check_branch
        %896 = sbr.rel (%p894) target = $region36
      $region35: #{deconv_bn_relu.1} parent=27 // pred_region
        _
      $region36: #{deconv_bn_relu.1} parent=27 // pred_fallthru
        _
      // Predicated region
      $region37: #{deconv_bn_relu.1} parent=27 // pred_check
        %p897 = pneg %p153
      $region38: #{deconv_bn_relu.1} parent=27 // pred_check_branch
        %899 = sbr.rel (%p897) target = $region40
      $region39: #{deconv_bn_relu.1} parent=27 // pred_region
        _
      $region40: #{deconv_bn_relu.1} parent=27 // pred_fallthru
        _
    $region28: #{deconv_bn_relu.1} parent=5 // pred_fallthru
      _
    %p900 = scmp.le.s32.totalorder 2, %s11
    // Predicated region
    $region41: #{deconv_bn_relu.1} parent=5 // pred_check
      %p901 = pneg %p900
    $region42: #{deconv_bn_relu.1} parent=5 // pred_check_branch
      %903 = sbr.rel (%p901) target = $region44
    $region43: #{deconv_bn_relu.1} parent=5 // pred_region
      %s904 = ssub.s32 %s11, 2
      // Predicated region
      $region45: #{deconv_bn_relu.1} parent=43 // pred_check
        %p905 = pneg %p103
      $region46: #{deconv_bn_relu.1} parent=43 // pred_check_branch
        %907 = sbr.rel (%p905) target = $region48
      $region47: #{deconv_bn_relu.1} parent=43 // pred_region
        %s908 = smul.u32 32, %s23
        %p909 = scmp.lt.s32.totalorder %s22, 1
        %s910 = scalar_select %p909, %s22, 1
        %p911 = scmp.lt.s32.totalorder %s908, 31
        %s912 = scalar_select %p911, %s908, 31
        %s913 = smul.addr %s910, 32
        %s914 = sadd.s32 %s912, %s913
        %s915 = smul.addr %s914, 4
        %s916 = scalar_lea.vmem %s2, %s915
      $region48: #{deconv_bn_relu.1} parent=43 // pred_fallthru
        _
      // Predicated region
      $region49: #{deconv_bn_relu.1} parent=43 // pred_check
        %p917 = pneg %p131
      $region50: #{deconv_bn_relu.1} parent=43 // pred_check_branch
        %919 = sbr.rel (%p917) target = $region52
      $region51: #{deconv_bn_relu.1} parent=43 // pred_region
        %p920 = scmp.lt.s32.totalorder %s22, 1
        %s921 = scalar_select %p920, %s22, 1
        %p922 = scmp.lt.s32.totalorder %s23, 0
        %s923 = scalar_select %p922, %s23, 0
        %s924 = sadd.s32 %s923, %s921
        %s925 = scalar_lea.vmem %s3, %s924
      $region52: #{deconv_bn_relu.1} parent=43 // pred_fallthru
        _
      // Predicated region
      $region53: #{deconv_bn_relu.1} parent=43 // pred_check
        %p926 = pneg %p159
      $region54: #{deconv_bn_relu.1} parent=43 // pred_check_branch
        %928 = sbr.rel (%p926) target = $region56
      $region55: #{deconv_bn_relu.1} parent=43 // pred_region
        %p929 = scmp.lt.s32.totalorder %s22, 1
        %s930 = scalar_select %p929, %s22, 1
        %p931 = scmp.lt.s32.totalorder %s23, 0
        %s932 = scalar_select %p931, %s23, 0
        %s933 = sadd.s32 %s932, %s930
        %s934 = scalar_lea.vmem %s4, %s933
      $region56: #{deconv_bn_relu.1} parent=43 // pred_fallthru
        _
    $region44: #{deconv_bn_relu.1} parent=5 // pred_fallthru
      _
  $region6: #{deconv_bn_relu.1} parent=0 // loop_footer
    %s15 = sadd.s32 1, %s11
  $region7: #{deconv_bn_relu.1} parent=0 // loop_footer_branch
    %10 = sbr.rel target = $region3
  $region8: #{deconv_bn_relu.1} parent=0 // loop_exit
    _

</llo_original>
